<compile_context>
chip_gen: v5e
topology: v5e:2x2
jax: 0.10.0
libtpu: 0.0.40
codegen_flags: <defaults>
</compile_context>

<pallas_src>
import jax
import jax.numpy as jnp
from jax.experimental import pallas as pl
from jax.experimental.pallas import tpu as pltpu


def _two_mlp_kernel(x_ref, w6_ref, b6_ref, w7_ref, b7_ref, o_ref):
    # fc6: MXU matmul with f32 accumulation, bias add + ReLU in f32.
    h = jnp.dot(x_ref[...], w6_ref[...], preferred_element_type=jnp.float32)
    h = jnp.maximum(h + b6_ref[...], 0.0)
    # fc7: cast only the matmul operand to the weight dtype; accumulate f32.
    # (tile_n=128, rep=128 -> h is 64 KiB = 16 vregs; no VMEM staging needed.)
    y = jnp.dot(h.astype(w7_ref.dtype), w7_ref[...],
                preferred_element_type=jnp.float32)
    y = jnp.maximum(y + b7_ref[...], 0.0)
    o_ref[...] = y.astype(o_ref.dtype)


def tracking_embedding(x_nchw, w6, b6, w7, b7, *, tile_n=128,
                       compute_dtype=jnp.bfloat16):
    """x_nchw: [N, C, H, W]; w6: [in_features, rep]; w7: [rep, rep] (pre-transposed)."""
    N = x_nchw.shape[0]
    x2d = x_nchw.reshape(N, -1)                       # == torch flatten(start_dim=1)
    in_features = x2d.shape[1]
    rep6 = w6.shape[1]
    rep7 = w7.shape[1]
    out_dtype = x2d.dtype

    # Cast matmul operands only; biases and accumulation stay f32.
    xc = x2d.astype(compute_dtype)
    w6c = w6.astype(compute_dtype)
    w7c = w7.astype(compute_dtype)
    b6_2d = b6.reshape(1, rep6).astype(jnp.float32)
    b7_2d = b7.reshape(1, rep7).astype(jnp.float32)

    # Pad the ROI axis up to a multiple of tile_n (padded rows are computed
    # but discarded); realistic ROI counts (e.g. 1000) are handled this way.
    n_pad = pl.cdiv(N, tile_n) * tile_n
    if n_pad != N:
        xc = jnp.pad(xc, ((0, n_pad - N), (0, 0)))
    grid = (n_pad // tile_n,)

    cbytes = jnp.dtype(compute_dtype).itemsize
    obytes = jnp.dtype(out_dtype).itemsize

    # VMEM budget: double-buffered x/out tiles + single-buffered weights + h.
    vmem_est = (2 * tile_n * in_features * cbytes
                + 2 * tile_n * rep7 * obytes
                + in_features * rep6 * cbytes
                + rep6 * rep7 * cbytes
                + (rep6 + rep7) * 4
                + tile_n * rep6 * 4)
    vmem_limit = min(max(int(1.5 * vmem_est) + (2 << 20), 32 << 20), 64 << 20)

    cost = pl.CostEstimate(
        flops=2 * n_pad * (in_features * rep6 + rep6 * rep7),
        transcendentals=0,
        bytes_accessed=(n_pad * in_features * cbytes
                        + in_features * rep6 * cbytes
                        + rep6 * rep7 * cbytes
                        + (rep6 + rep7) * 4
                        + n_pad * rep7 * obytes),
    )

    # Weights / biases: constant block index -> single-buffered residents.
    w6_spec = pl.BlockSpec((in_features, rep6), lambda i: (0, 0),
                           pipeline_mode=pl.Buffered(1))
    b6_spec = pl.BlockSpec((1, rep6), lambda i: (0, 0),
                           pipeline_mode=pl.Buffered(1))
    w7_spec = pl.BlockSpec((rep6, rep7), lambda i: (0, 0),
                           pipeline_mode=pl.Buffered(1))
    b7_spec = pl.BlockSpec((1, rep7), lambda i: (0, 0),
                           pipeline_mode=pl.Buffered(1))

    out_padded = pl.pallas_call(
        _two_mlp_kernel,
        out_shape=jax.ShapeDtypeStruct((n_pad, rep7), out_dtype),
        grid_spec=pltpu.PrefetchScalarGridSpec(
            num_scalar_prefetch=0,
            grid=grid,
            in_specs=[
                pl.BlockSpec((tile_n, in_features), lambda i: (i, 0)),  # x tile
                w6_spec, b6_spec, w7_spec, b7_spec,
            ],
            out_specs=pl.BlockSpec((tile_n, rep7), lambda i: (i, 0)),
        ),
        compiler_params=pltpu.CompilerParams(
            dimension_semantics=("parallel",),
            vmem_limit_bytes=vmem_limit,
        ),
        cost_estimate=cost,
    )(xc, w6c, b6_2d, w7c, b7_2d)

    return out_padded[:N]


def reference(x_nchw, w6, b6, w7, b7, *, compute_dtype=jnp.float32):
    """Plain-JAX reference with the same operand dtype / f32-accumulate recipe."""
    x2d = x_nchw.reshape(x_nchw.shape[0], -1).astype(compute_dtype)
    h = jnp.dot(x2d, w6.astype(compute_dtype),
                preferred_element_type=jnp.float32) + b6.astype(jnp.float32)
    h = jnp.maximum(h, 0.0)
    y = jnp.dot(h.astype(compute_dtype), w7.astype(compute_dtype),
                preferred_element_type=jnp.float32) + b7.astype(jnp.float32)
    return jnp.maximum(y, 0.0)


if __name__ == "__main__":
    # Small shapes consistent with the module's forward:
    #   x: [N, C, H, W] -> flatten -> [N, C*H*W]
    # N=200 ROIs exercises the padding path (pads to 256 -> grid of 2 tiles,
    # an even step count so both v7x TensorCores get work).
    N, C, H, W = 200, 4, 8, 8
    in_channels = C * H * W               # 256
    representation_size = 128

    key = jax.random.PRNGKey(0)
    kx, k6w, k6b, k7w, k7b = jax.random.split(key, 5)

    x = jax.random.normal(kx, (N, C, H, W), dtype=jnp.float32)

    # Deterministic parameter init (uniform, roughly PyTorch Linear scale).
    bound6 = 1.0 / (in_channels ** 0.5)
    bound7 = 1.0 / (representation_size ** 0.5)
    # Stored pre-transposed: (in, out)
    w6 = jax.random.uniform(k6w, (in_channels, representation_size),
                            minval=-bound6, maxval=bound6, dtype=jnp.float32)
    b6 = jax.random.uniform(k6b, (representation_size,),
                            minval=-bound6, maxval=bound6, dtype=jnp.float32)
    w7 = jax.random.uniform(k7w, (representation_size, representation_size),
                            minval=-bound7, maxval=bound7, dtype=jnp.float32)
    b7 = jax.random.uniform(k7b, (representation_size,),
                            minval=-bound7, maxval=bound7, dtype=jnp.float32)

    # 1) f32-operand path: bit-level comparable to the PyTorch fp32 reference.
    out_f32 = tracking_embedding(x, w6, b6, w7, b7, compute_dtype=jnp.float32)
    out_f32 = jax.block_until_ready(out_f32)
    ref_f32 = reference(x, w6, b6, w7, b7, compute_dtype=jnp.float32)
    assert out_f32.shape == (N, representation_size)
    assert out_f32.dtype == jnp.float32
    assert jnp.allclose(out_f32, ref_f32, atol=1e-4, rtol=1e-4)

    # 2) default bf16-operand path (2x MXU rate on v6e/v7x), checked against a
    #    matching bf16-operand / f32-accumulate reference.
    out_bf16 = tracking_embedding(x, w6, b6, w7, b7)
    out_bf16 = jax.block_until_ready(out_bf16)
    ref_bf16 = reference(x, w6, b6, w7, b7, compute_dtype=jnp.bfloat16)
    assert out_bf16.shape == (N, representation_size)
    assert out_bf16.dtype == jnp.float32
    assert jnp.allclose(out_bf16, ref_bf16, atol=1e-2, rtol=1e-2)

    print("KERNEL_OK")
</pallas_src>

<mosaic_0001>
module attributes {stable_mosaic.version = 11 : i64} {
  func.func @_two_mlp_kernel(%arg0: i32, %arg1: memref<128x256xf32, #tpu.memory_space<vmem>>, %arg2: memref<256x128xf32, #tpu.memory_space<vmem>>, %arg3: memref<1x128xf32, #tpu.memory_space<vmem>>, %arg4: memref<128x128xf32, #tpu.memory_space<vmem>>, %arg5: memref<1x128xf32, #tpu.memory_space<vmem>>, %arg6: memref<128x128xf32, #tpu.memory_space<vmem>>) attributes {dimension_semantics = [#tpu.dimension_semantics<parallel>], iteration_bounds = array<i64: 2>, scalar_prefetch = 0 : i64, scratch_operands = 0 : i64, tpu.core_type = #tpu.core_type<tc>, window_params = [{transform_indices = @transform_0, window_bounds = array<i64: 128, 256>}, {pipeline_mode = #tpu.pipeline_mode<synchronous>, transform_indices = @transform_1, window_bounds = array<i64: 256, 128>}, {pipeline_mode = #tpu.pipeline_mode<synchronous>, transform_indices = @transform_2, window_bounds = array<i64: 1, 128>}, {pipeline_mode = #tpu.pipeline_mode<synchronous>, transform_indices = @transform_3, window_bounds = array<i64: 128, 128>}, {pipeline_mode = #tpu.pipeline_mode<synchronous>, transform_indices = @transform_4, window_bounds = array<i64: 1, 128>}, {transform_indices = @transform_5, window_bounds = array<i64: 128, 128>}]} {
    %c0 = arith.constant 0 : index
    %c0_0 = arith.constant 0 : index
    %0 = vector.load %arg1[%c0, %c0_0] : memref<128x256xf32, #tpu.memory_space<vmem>>, vector<128x256xf32>
    %c0_1 = arith.constant 0 : index
    %c0_2 = arith.constant 0 : index
    %1 = vector.load %arg2[%c0_1, %c0_2] : memref<256x128xf32, #tpu.memory_space<vmem>>, vector<256x128xf32>
    %cst = arith.constant dense<0.000000e+00> : vector<128x128xf32>
    %2 = tpu.matmul %0, %1, %cst {dimension_numbers = #tpu.dot_dimension_numbers<[1], [0], [0], [1], [0, 0, 1, 1], [], []>} : vector<128x256xf32>, vector<256x128xf32>, vector<128x128xf32> -> vector<128x128xf32>
    %c0_3 = arith.constant 0 : index
    %c0_4 = arith.constant 0 : index
    %3 = vector.load %arg3[%c0_3, %c0_4] : memref<1x128xf32, #tpu.memory_space<vmem>>, vector<1x128xf32>
    %4 = vector.broadcast %3 : vector<1x128xf32> to vector<128x128xf32>
    %5 = arith.addf %2, %4 : vector<128x128xf32>
    %cst_5 = arith.constant 0.000000e+00 : f32
    %6 = vector.broadcast %cst_5 : f32 to vector<128x128xf32>
    %7 = arith.maximumf %5, %6 : vector<128x128xf32>
    %c0_6 = arith.constant 0 : index
    %c0_7 = arith.constant 0 : index
    %8 = vector.load %arg4[%c0_6, %c0_7] : memref<128x128xf32, #tpu.memory_space<vmem>>, vector<128x128xf32>
    %cst_8 = arith.constant dense<0.000000e+00> : vector<128x128xf32>
    %9 = tpu.matmul %7, %8, %cst_8 {dimension_numbers = #tpu.dot_dimension_numbers<[1], [0], [0], [1], [0, 0, 1, 1], [], []>} : vector<128x128xf32>, vector<128x128xf32>, vector<128x128xf32> -> vector<128x128xf32>
    %c0_9 = arith.constant 0 : index
    %c0_10 = arith.constant 0 : index
    %10 = vector.load %arg5[%c0_9, %c0_10] : memref<1x128xf32, #tpu.memory_space<vmem>>, vector<1x128xf32>
    %11 = vector.broadcast %10 : vector<1x128xf32> to vector<128x128xf32>
    %12 = arith.addf %9, %11 : vector<128x128xf32>
    %cst_11 = arith.constant 0.000000e+00 : f32
    %13 = vector.broadcast %cst_11 : f32 to vector<128x128xf32>
    %14 = arith.maximumf %12, %13 : vector<128x128xf32>
    %c0_12 = arith.constant 0 : index
    %c0_13 = arith.constant 0 : index
    %15 = vector.load %arg6[%c0_12, %c0_13] : memref<128x128xf32, #tpu.memory_space<vmem>>, vector<128x128xf32>
    tpu.vector_store %arg6[%c0_12, %c0_13], %14 {strides = array<i32>} : memref<128x128xf32, #tpu.memory_space<vmem>>, vector<128x128xf32>,
    return
  }
  func.func @transform_0(%arg0: i32) -> (i32, i32) {
    %c0_i32 = arith.constant 0 : i32
    %c0_i32_0 = arith.constant 0 : i32
    return %arg0, %c0_i32 : i32, i32
  }
  func.func @transform_1(%arg0: i32) -> (i32, i32) {
    %c0_i32 = arith.constant 0 : i32
    %c0_i32_0 = arith.constant 0 : i32
    %c0_i32_1 = arith.constant 0 : i32
    return %c0_i32, %c0_i32_0 : i32, i32
  }
  func.func @transform_2(%arg0: i32) -> (i32, i32) {
    %c0_i32 = arith.constant 0 : i32
    %c0_i32_0 = arith.constant 0 : i32
    %c0_i32_1 = arith.constant 0 : i32
    return %c0_i32, %c0_i32_0 : i32, i32
  }
  func.func @transform_3(%arg0: i32) -> (i32, i32) {
    %c0_i32 = arith.constant 0 : i32
    %c0_i32_0 = arith.constant 0 : i32
    %c0_i32_1 = arith.constant 0 : i32
    return %c0_i32, %c0_i32_0 : i32, i32
  }
  func.func @transform_4(%arg0: i32) -> (i32, i32) {
    %c0_i32 = arith.constant 0 : i32
    %c0_i32_0 = arith.constant 0 : i32
    %c0_i32_1 = arith.constant 0 : i32
    return %c0_i32, %c0_i32_0 : i32, i32
  }
  func.func @transform_5(%arg0: i32) -> (i32, i32) {
    %c0_i32 = arith.constant 0 : i32
    %c0_i32_0 = arith.constant 0 : i32
    return %arg0, %c0_i32 : i32, i32
  }
}

</mosaic_0001>

<llo_original>
// kernel: tpu_custom_call.1
$region0: #{tpu_custom_call.1}
  #allocation0 [shape = 'u32[]', space=smem, size = 0x4, offset = 0x4, fixed_abs, tag = 'smem constant byte address 0x4 - core index']
  #allocation1 [shape = 'u32[72,128]{1,0:T(1,128)}', space=vmem, size = 0x9000, scoped, tag = 'internal scratch']
  %s0 = inlined_call_operand.hbm [shape: f32[256,256], index: 0, kind: input, shape index: {}]
  %s1 = inlined_call_operand.hbm [shape: f32[256,128], index: 1, kind: input, shape index: {}]
  %s2 = inlined_call_operand.vmem [shape: f32[1,128], index: 2, kind: input, shape index: {}]
  %s3 = inlined_call_operand.hbm [shape: f32[128,128], index: 3, kind: input, shape index: {}]
  %s4 = inlined_call_operand.vmem [shape: f32[1,128], index: 4, kind: input, shape index: {}]
  %s5 = inlined_call_operand.hbm [shape: f32[256,128], index: 5, kind: output, shape index: {}]
  %s6 = sld [smem:[#allocation0]]
  $region65: #{tpu_custom_call.1} parent=0
    _
  %s8 = ssub.s32 1, %s6
  %s9 = scalar_select 0, %s8, %s6
  $region1: #{tpu_custom_call.1} parent=0
    #allocation2 [shape = 'u8[262144]{0}', space=vmem, size = 0x40000, scoped, tag = 'input window, operand 0']
    #allocation3 [shape = 's32[2]{0}', space=sflag, size = 0x8, scoped, tag = 'scoped memory for tpu_custom_call.1']
    #allocation4 [shape = 's32[2]{0}', space=sflag, size = 0x8, scoped, tag = 'scoped memory for tpu_custom_call.1']
    #allocation5 [shape = 'u8[131072]{0}', space=vmem, size = 0x20000, scoped, tag = 'input window, operand 1, single buffered']
    #allocation6 [shape = 's32[1]{0}', space=sflag, size = 0x4, scoped, tag = 'scoped memory for tpu_custom_call.1']
    #allocation7 [shape = 'u8[65536]{0}', space=vmem, size = 0x10000, scoped, tag = 'input window, operand 3, single buffered']
    #allocation8 [shape = 'u8[131072]{0}', space=vmem, size = 0x20000, scoped, tag = 'output window, operand 0']
    %10 = vsyncpa [#allocation3], 0
    %s11 = scalar_lea.sflag [#allocation3], 1
    %12 = vsyncpa %s11, 0
    %13 = vsyncpa [#allocation6], 0
    %14 = vsyncpa [#allocation4], 0
    %s15 = scalar_lea.sflag [#allocation4], 1
    %16 = vsyncpa %s15, 0
    loop: start=0, step=1, limit=4
    $region2: #{tpu_custom_call.1} parent=1 // loop_pre_header
      _
    $region3: #{tpu_custom_call.1} parent=1 // loop_header
      %s18 = sphi 0, %s22
      %p19 = scmp.ge.s32.totalorder %s18, 4
      %s28 = sphi 0, %s30
      %s31 = sphi 0, %s28
      %s32 = sphi 0, %s31
      %s48 = sphi 0, %s32
      %s52 = sphi 0, %s52
      %s54 = sphi 0, %s52
      %s55 = sphi 0, %s54
      %s69 = sphi 0, %s55
      %s73 = sphi 0, %s73
      %s75 = sphi 0, %s73
      %s76 = sphi 0, %s75
      %s90 = sphi 0, %s76
      %s94 = sphi 0, %s94
      %s96 = sphi 0, %s94
      %s97 = sphi 0, %s96
      %s111 = sphi 0, %s97
      %s115 = sphi 0, %s115
      %s117 = sphi 0, %s115
      %s118 = sphi 0, %s117
      %s132 = sphi 0, %s118
      %s138 = sphi 0, %s140
      %s141 = sphi 0, %s138
      %s142 = sphi 0, %s141
      %s158 = sphi 0, %s142
    $region4: #{tpu_custom_call.1} parent=1 // loop_header_branch
      %21 = sbr.rel (%p19) target = $region8
    $region5: #{tpu_custom_call.1} parent=1 // loop_body
      %s23 = ssub.s32 %s18, 1
      %s24 = ssub.s32 %s18, 2
      %s25 = sadd.s32 %s18, 1
      %s26 = ssub.s32 %s18, %s25
      %p27 = scmp.eq.s32.totalorder %s26, 0
      %s29 = sadd.s32 %s28, 1
      %s30 = scalar_select %p27, %s28, %s29
      %p33 = pneg %p27
      %p34 = scmp.eq.s32.totalorder %s18, 1
      %p35 = por %p33, %p34
      %p36 = scmp.ne.s32.totalorder %s28, %s31
      %p37 = scmp.eq.s32.totalorder %s18, 0
      %p38 = por %p36, %p37
      %p39 = scmp.ne.s32.totalorder %s28, %s31
      %p40 = scmp.eq.s32.totalorder %s23, 1
      %p41 = por %p39, %p40
      %p42 = scmp.ne.s32.totalorder %s31, %s32
      %p43 = scmp.eq.s32.totalorder %s23, 0
      %p44 = por %p42, %p43
      %p45 = scmp.ne.s32.totalorder %s31, %s32
      %p46 = scmp.eq.s32.totalorder %s24, 1
      %p47 = por %p45, %p46
      %p49 = scmp.ne.s32.totalorder %s32, %s48
      %p50 = scmp.eq.s32.totalorder %s24, 0
      %p51 = por %p49, %p50
      %s53 = sadd.s32 %s52, 1
      %p56 = scmp.eq.s32.totalorder %s18, 1
      %p57 = scmp.ne.s32.totalorder %s52, %s54
      %p58 = scmp.eq.s32.totalorder %s18, 0
      %p59 = por %p57, %p58
      %p60 = scmp.ne.s32.totalorder %s52, %s54
      %p61 = scmp.eq.s32.totalorder %s23, 1
      %p62 = por %p60, %p61
      %p63 = scmp.ne.s32.totalorder %s54, %s55
      %p64 = scmp.eq.s32.totalorder %s23, 0
      %p65 = por %p63, %p64
      %p66 = scmp.ne.s32.totalorder %s54, %s55
      %p67 = scmp.eq.s32.totalorder %s24, 1
      %p68 = por %p66, %p67
      %p70 = scmp.ne.s32.totalorder %s55, %s69
      %p71 = scmp.eq.s32.totalorder %s24, 0
      %p72 = por %p70, %p71
      %s74 = sadd.s32 %s73, 1
      %p77 = scmp.eq.s32.totalorder %s18, 1
      %p78 = scmp.ne.s32.totalorder %s73, %s75
      %p79 = scmp.eq.s32.totalorder %s18, 0
      %p80 = por %p78, %p79
      %p81 = scmp.ne.s32.totalorder %s73, %s75
      %p82 = scmp.eq.s32.totalorder %s23, 1
      %p83 = por %p81, %p82
      %p84 = scmp.ne.s32.totalorder %s75, %s76
      %p85 = scmp.eq.s32.totalorder %s23, 0
      %p86 = por %p84, %p85
      %p87 = scmp.ne.s32.totalorder %s75, %s76
      %p88 = scmp.eq.s32.totalorder %s24, 1
      %p89 = por %p87, %p88
      %p91 = scmp.ne.s32.totalorder %s76, %s90
      %p92 = scmp.eq.s32.totalorder %s24, 0
      %p93 = por %p91, %p92
      %s95 = sadd.s32 %s94, 1
      %p98 = scmp.eq.s32.totalorder %s18, 1
      %p99 = scmp.ne.s32.totalorder %s94, %s96
      %p100 = scmp.eq.s32.totalorder %s18, 0
      %p101 = por %p99, %p100
      %p102 = scmp.ne.s32.totalorder %s94, %s96
      %p103 = scmp.eq.s32.totalorder %s23, 1
      %p104 = por %p102, %p103
      %p105 = scmp.ne.s32.totalorder %s96, %s97
      %p106 = scmp.eq.s32.totalorder %s23, 0
      %p107 = por %p105, %p106
      %p108 = scmp.ne.s32.totalorder %s96, %s97
      %p109 = scmp.eq.s32.totalorder %s24, 1
      %p110 = por %p108, %p109
      %p112 = scmp.ne.s32.totalorder %s97, %s111
      %p113 = scmp.eq.s32.totalorder %s24, 0
      %p114 = por %p112, %p113
      %s116 = sadd.s32 %s115, 1
      %p119 = scmp.eq.s32.totalorder %s18, 1
      %p120 = scmp.ne.s32.totalorder %s115, %s117
      %p121 = scmp.eq.s32.totalorder %s18, 0
      %p122 = por %p120, %p121
      %p123 = scmp.ne.s32.totalorder %s115, %s117
      %p124 = scmp.eq.s32.totalorder %s23, 1
      %p125 = por %p123, %p124
      %p126 = scmp.ne.s32.totalorder %s117, %s118
      %p127 = scmp.eq.s32.totalorder %s23, 0
      %p128 = por %p126, %p127
      %p129 = scmp.ne.s32.totalorder %s117, %s118
      %p130 = scmp.eq.s32.totalorder %s24, 1
      %p131 = por %p129, %p130
      %p133 = scmp.ne.s32.totalorder %s118, %s132
      %p134 = scmp.eq.s32.totalorder %s24, 0
      %p135 = por %p133, %p134
      %s136 = ssub.s32 %s18, %s25
      %p137 = scmp.eq.s32.totalorder %s136, 0
      %s139 = sadd.s32 %s138, 1
      %s140 = scalar_select %p137, %s138, %s139
      %p143 = pneg %p137
      %p144 = scmp.eq.s32.totalorder %s18, 1
      %p145 = por %p143, %p144
      %p146 = scmp.ne.s32.totalorder %s138, %s141
      %p147 = scmp.eq.s32.totalorder %s18, 0
      %p148 = por %p146, %p147
      %p149 = scmp.ne.s32.totalorder %s138, %s141
      %p150 = scmp.eq.s32.totalorder %s23, 1
      %p151 = por %p149, %p150
      %p152 = scmp.ne.s32.totalorder %s141, %s142
      %p153 = scmp.eq.s32.totalorder %s23, 0
      %p154 = por %p152, %p153
      %p155 = scmp.ne.s32.totalorder %s141, %s142
      %p156 = scmp.eq.s32.totalorder %s24, 1
      %p157 = por %p155, %p156
      %p159 = scmp.ne.s32.totalorder %s142, %s158
      %p160 = scmp.eq.s32.totalorder %s24, 0
      %p161 = por %p159, %p160
      %p162 = scmp.le.s32.totalorder 1, %s18
      %p163 = scmp.lt.s32.totalorder %s18, 3
      %p164 = pnand %p162, %p163
      %p165 = pneg %p164
      // Predicated region
      $region9: #{tpu_custom_call.1} parent=5 // pred_check
        _
      $region10: #{tpu_custom_call.1} parent=5 // pred_check_branch
        %167 = sbr.rel (%p164) target = $region12
      $region11: #{tpu_custom_call.1} parent=5 // pred_region
        %s168 = ssub.s32 %s18, 1
        // Predicated region
        $region13: #{tpu_custom_call.1} parent=11 // pred_check
          %p169 = pneg %p65
        $region14: #{tpu_custom_call.1} parent=11 // pred_check_branch
          %171 = sbr.rel (%p169) target = $region16
        $region15: #{tpu_custom_call.1} parent=11 // pred_region
          %173 = vsyncadd [#allocation6], 0
          %s174 = sshll.u32 %s1, 4
          %s175 = int_to_ptr.hbm [resolvable:$true] %s174
          %s176 = sshll.u32 [#allocation5], 4
          %s177 = int_to_ptr.vmem [resolvable:$true] %s176
          %182 = dma.hbm_to_vmem [thread:$0]  %s175, 4096, %s177, [#allocation6], 128, 128, 8
        $region16: #{tpu_custom_call.1} parent=11 // pred_fallthru
          _
        // Predicated region
        $region17: #{tpu_custom_call.1} parent=11 // pred_check
          %p183 = pneg %p86
        $region18: #{tpu_custom_call.1} parent=11 // pred_check_branch
          %185 = sbr.rel (%p183) target = $region20
        $region19: #{tpu_custom_call.1} parent=11 // pred_region
          _
        $region20: #{tpu_custom_call.1} parent=11 // pred_fallthru
          _
        // Predicated region
        $region21: #{tpu_custom_call.1} parent=11 // pred_check
          %p186 = pneg %p107
        $region22: #{tpu_custom_call.1} parent=11 // pred_check_branch
          %188 = sbr.rel (%p186) target = $region24
        $region23: #{tpu_custom_call.1} parent=11 // pred_region
          %190 = vsyncadd [#allocation6], 0
          %s191 = sshll.u32 %s3, 4
          %s192 = int_to_ptr.hbm [resolvable:$true] %s191
          %s193 = sshll.u32 [#allocation7], 4
          %s194 = int_to_ptr.vmem [resolvable:$true] %s193
          %199 = dma.hbm_to_vmem [thread:$0]  %s192, 2048, %s194, [#allocation6], 128, 128, 8
        $region24: #{tpu_custom_call.1} parent=11 // pred_fallthru
          _
        // Predicated region
        $region25: #{tpu_custom_call.1} parent=11 // pred_check
          %p200 = pneg %p128
        $region26: #{tpu_custom_call.1} parent=11 // pred_check_branch
          %202 = sbr.rel (%p200) target = $region28
        $region27: #{tpu_custom_call.1} parent=11 // pred_region
          _
        $region28: #{tpu_custom_call.1} parent=11 // pred_fallthru
          _
      $region12: #{tpu_custom_call.1} parent=5 // pred_fallthru
        _
      %p203 = scmp.lt.s32.totalorder %s18, 2
      // Predicated region
      $region29: #{tpu_custom_call.1} parent=5 // pred_check
        %p204 = pneg %p203
      $region30: #{tpu_custom_call.1} parent=5 // pred_check_branch
        %206 = sbr.rel (%p204) target = $region32
      $region31: #{tpu_custom_call.1} parent=5 // pred_region
        // Predicated region
        $region33: #{tpu_custom_call.1} parent=31 // pred_check
          %p207 = pneg %p38
        $region34: #{tpu_custom_call.1} parent=31 // pred_check_branch
          %209 = sbr.rel (%p207) target = $region36
        $region35: #{tpu_custom_call.1} parent=31 // pred_region
          %s210 = sand.u32 %s28, 1
          %s211 = scalar_lea.sflag [#allocation3], %s210
          %s212 = sand.u32 %s28, 1
          %s213 = smul.addr %s212, 256
          %s214 = scalar_lea.vmem [#allocation2], %s213
          %s215 = smul.u32 16, %s18
          %217 = vsyncadd %s211, 0
          %s218 = smul.addr %s215, 2
          %s219 = smul.addr %s218, 8
          %s220 = scalar_lea.hbm %s0, %s219
          %s221 = sshll.u32 %s220, 4
          %s222 = int_to_ptr.hbm [resolvable:$true] %s221
          %s223 = sshll.u32 %s214, 4
          %s224 = int_to_ptr.vmem [resolvable:$true] %s223
          %229 = dma.hbm_to_vmem [thread:$0]  %s222, 4096, %s224, %s211, 256, 256, 16
        $region36: #{tpu_custom_call.1} parent=31 // pred_fallthru
          _
      $region32: #{tpu_custom_call.1} parent=5 // pred_fallthru
        _
      %p230 = scmp.le.s32.totalorder 1, %s18
      %p231 = scmp.lt.s32.totalorder %s18, 3
      %p232 = pnand %p230, %p231
      %p233 = pneg %p232
      // Predicated region
      $region37: #{tpu_custom_call.1} parent=5 // pred_check
        _
      $region38: #{tpu_custom_call.1} parent=5 // pred_check_branch
        %235 = sbr.rel (%p232) target = $region40
      $region39: #{tpu_custom_call.1} parent=5 // pred_region
        %s236 = ssub.s32 %s18, 1
        %s237 = sand.u32 %s31, 1
        %s238 = scalar_lea.sflag [#allocation3], %s237
        %s239 = sand.u32 %s31, 1
        %s240 = smul.addr %s239, 256
        %s241 = scalar_lea.vmem [#allocation2], %s240
        // Predicated region
        $region41: #{tpu_custom_call.1} parent=39 // pred_check
          %p242 = pneg %p44
        $region42: #{tpu_custom_call.1} parent=39 // pred_check_branch
          %244 = sbr.rel (%p242) target = $region44
        $region43: #{tpu_custom_call.1} parent=39 // pred_region
          %246 = dma.done %s238, 4096
        $region44: #{tpu_custom_call.1} parent=39 // pred_fallthru
          _
        // Predicated region
        $region45: #{tpu_custom_call.1} parent=39 // pred_check
          %p247 = pneg %p65
        $region46: #{tpu_custom_call.1} parent=39 // pred_check_branch
          %249 = sbr.rel (%p247) target = $region48
        $region47: #{tpu_custom_call.1} parent=39 // pred_region
          %251 = dma.done [#allocation6], 4096
        $region48: #{tpu_custom_call.1} parent=39 // pred_fallthru
          _
        // Predicated region
        $region49: #{tpu_custom_call.1} parent=39 // pred_check
          %p252 = pneg %p107
        $region50: #{tpu_custom_call.1} parent=39 // pred_check_branch
          %254 = sbr.rel (%p252) target = $region52
        $region51: #{tpu_custom_call.1} parent=39 // pred_region
          %256 = dma.done [#allocation6], 2048
        $region52: #{tpu_custom_call.1} parent=39 // pred_fallthru
          _
        %s257 = sand.u32 %s31, 1
        %s258 = scalar_lea.sflag [#allocation3], %s257
        %s259 = sand.u32 %s31, 1
        %s260 = smul.addr %s259, 256
        %s261 = scalar_lea.vmem [#allocation2], %s260
        %p262 = pneg %p44
        %p263 = pneg %p41
        %p264 = pneg %p65
        %p265 = pneg %p62
        %p266 = pneg %p86
        %p267 = pneg %p83
        %p268 = pneg %p107
        %p269 = pneg %p104
        %p270 = pneg %p128
        %p271 = pneg %p125
        %p272 = pneg %p154
        %p273 = pneg %p151
        %s274 = sand.u32 %s141, 1
        %s275 = scalar_lea.sflag [#allocation4], %s274
        %s276 = sand.u32 %s141, 1
        %s277 = smul.addr %s276, 128
        %s278 = scalar_lea.vmem [#allocation8], %s277
        %s279 = smul.u32 16, %s23
        %s280 = smul.u32 16, %s23
        %v281 = vld [vmem:[%s241] sm:$0xff]
        %v282 = vld [vmem:[%s241 + $0x8] sm:$0xff]
        %v283 = vld [vmem:[%s241 + $0x10] sm:$0xff]
        %v284 = vld [vmem:[%s241 + $0x18] sm:$0xff]
        %v285 = vld [vmem:[%s241 + $0x20] sm:$0xff]
        %v286 = vld [vmem:[%s241 + $0x28] sm:$0xff]
        %v287 = vld [vmem:[%s241 + $0x30] sm:$0xff]
        %v288 = vld [vmem:[%s241 + $0x38] sm:$0xff]
        %v289 = vld [vmem:[%s241 + $0x40] sm:$0xff]
        %v290 = vld [vmem:[%s241 + $0x48] sm:$0xff]
        %v291 = vld [vmem:[%s241 + $0x50] sm:$0xff]
        %v292 = vld [vmem:[%s241 + $0x58] sm:$0xff]
        %v293 = vld [vmem:[%s241 + $0x60] sm:$0xff]
        %v294 = vld [vmem:[%s241 + $0x68] sm:$0xff]
        %v295 = vld [vmem:[%s241 + $0x70] sm:$0xff]
        %v296 = vld [vmem:[%s241 + $0x78] sm:$0xff]
        %v297 = vld [vmem:[%s241 + $0x80] sm:$0xff]
        %v298 = vld [vmem:[%s241 + $0x88] sm:$0xff]
        %v299 = vld [vmem:[%s241 + $0x90] sm:$0xff]
        %v300 = vld [vmem:[%s241 + $0x98] sm:$0xff]
        %v301 = vld [vmem:[%s241 + $0xa0] sm:$0xff]
        %v302 = vld [vmem:[%s241 + $0xa8] sm:$0xff]
        %v303 = vld [vmem:[%s241 + $0xb0] sm:$0xff]
        %v304 = vld [vmem:[%s241 + $0xb8] sm:$0xff]
        %v305 = vld [vmem:[%s241 + $0xc0] sm:$0xff]
        %v306 = vld [vmem:[%s241 + $0xc8] sm:$0xff]
        %v307 = vld [vmem:[%s241 + $0xd0] sm:$0xff]
        %v308 = vld [vmem:[%s241 + $0xd8] sm:$0xff]
        %v309 = vld [vmem:[%s241 + $0xe0] sm:$0xff]
        %v310 = vld [vmem:[%s241 + $0xe8] sm:$0xff]
        %v311 = vld [vmem:[%s241 + $0xf0] sm:$0xff]
        %v312 = vld [vmem:[%s241 + $0xf8] sm:$0xff]
        %v313 = vld [vmem:[#allocation5] sm:$0xff]
        %v314 = vld [vmem:[#allocation5 + $0x8] sm:$0xff]
        %v315 = vld [vmem:[#allocation5 + $0x10] sm:$0xff]
        %v316 = vld [vmem:[#allocation5 + $0x18] sm:$0xff]
        %v317 = vld [vmem:[#allocation5 + $0x20] sm:$0xff]
        %v318 = vld [vmem:[#allocation5 + $0x28] sm:$0xff]
        %v319 = vld [vmem:[#allocation5 + $0x30] sm:$0xff]
        %v320 = vld [vmem:[#allocation5 + $0x38] sm:$0xff]
        %v321 = vld [vmem:[#allocation5 + $0x40] sm:$0xff]
        %v322 = vld [vmem:[#allocation5 + $0x48] sm:$0xff]
        %v323 = vld [vmem:[#allocation5 + $0x50] sm:$0xff]
        %v324 = vld [vmem:[#allocation5 + $0x58] sm:$0xff]
        %v325 = vld [vmem:[#allocation5 + $0x60] sm:$0xff]
        %v326 = vld [vmem:[#allocation5 + $0x68] sm:$0xff]
        %v327 = vld [vmem:[#allocation5 + $0x70] sm:$0xff]
        %v328 = vld [vmem:[#allocation5 + $0x78] sm:$0xff]
        %v329 = vld [vmem:[#allocation5 + $0x80] sm:$0xff]
        %v330 = vld [vmem:[#allocation5 + $0x88] sm:$0xff]
        %v331 = vld [vmem:[#allocation5 + $0x90] sm:$0xff]
        %v332 = vld [vmem:[#allocation5 + $0x98] sm:$0xff]
        %v333 = vld [vmem:[#allocation5 + $0xa0] sm:$0xff]
        %v334 = vld [vmem:[#allocation5 + $0xa8] sm:$0xff]
        %v335 = vld [vmem:[#allocation5 + $0xb0] sm:$0xff]
        %v336 = vld [vmem:[#allocation5 + $0xb8] sm:$0xff]
        %v337 = vld [vmem:[#allocation5 + $0xc0] sm:$0xff]
        %v338 = vld [vmem:[#allocation5 + $0xc8] sm:$0xff]
        %v339 = vld [vmem:[#allocation5 + $0xd0] sm:$0xff]
        %v340 = vld [vmem:[#allocation5 + $0xd8] sm:$0xff]
        %v341 = vld [vmem:[#allocation5 + $0xe0] sm:$0xff]
        %v342 = vld [vmem:[#allocation5 + $0xe8] sm:$0xff]
        %v343 = vld [vmem:[#allocation5 + $0xf0] sm:$0xff]
        %v344 = vld [vmem:[#allocation5 + $0xf8] sm:$0xff]
        %v345 = vld [vmem:[%s2] sm:$0x1]
        %v347 = vperm.slane %v345, 0
        %349 = vmatpush.msra.mxu0 %v328
        %350 = vmatpush.msra.mxu0 %v327
        %351 = vmatpush.msra.mxu0 %v326
        %352 = vmatpush.msra.mxu0 %v325
        %353 = vmatpush.msra.mxu0 %v324
        %354 = vmatpush.msra.mxu0 %v323
        %355 = vmatpush.msra.mxu0 %v322
        %356 = vmatpush.msra.mxu0 %v321
        %357 = vmatpush.msra.mxu0 %v320
        %358 = vmatpush.msra.mxu0 %v319
        %359 = vmatpush.msra.mxu0 %v318
        %360 = vmatpush.msra.mxu0 %v317
        %361 = vmatpush.msra.mxu0 %v316
        %362 = vmatpush.msra.mxu0 %v315
        %363 = vmatpush.msra.mxu0 %v314
        %364 = vmatpush.msra.mxu0 %v313
        %365 = vmatmul.f32.gmra.mxu0 %v281
        %v366 = vpop.f32.mrf.mxu0
        %v367 = vadd.f32 %v347, %v366
        %368 = vmatmul.f32.gmra.mxu0 %v283
        %v369 = vpop.f32.mrf.mxu0
        %v370 = vadd.f32 %v347, %v369
        %371 = vmatmul.f32.gmra.mxu0 %v285
        %v372 = vpop.f32.mrf.mxu0
        %v373 = vadd.f32 %v347, %v372
        %374 = vmatmul.f32.gmra.mxu0 %v287
        %v375 = vpop.f32.mrf.mxu0
        %v376 = vadd.f32 %v347, %v375
        %377 = vmatmul.f32.gmra.mxu0 %v289
        %v378 = vpop.f32.mrf.mxu0
        %v379 = vadd.f32 %v347, %v378
        %380 = vmatmul.f32.gmra.mxu0 %v291
        %v381 = vpop.f32.mrf.mxu0
        %v382 = vadd.f32 %v347, %v381
        %383 = vmatmul.f32.gmra.mxu0 %v293
        %v384 = vpop.f32.mrf.mxu0
        %v385 = vadd.f32 %v347, %v384
        %386 = vmatmul.f32.gmra.mxu0 %v295
        %v387 = vpop.f32.mrf.mxu0
        %v388 = vadd.f32 %v347, %v387
        %389 = vmatmul.f32.gmra.mxu0 %v297
        %v390 = vpop.f32.mrf.mxu0
        %v391 = vadd.f32 %v347, %v390
        %392 = vmatmul.f32.gmra.mxu0 %v299
        %v393 = vpop.f32.mrf.mxu0
        %v394 = vadd.f32 %v347, %v393
        %395 = vmatmul.f32.gmra.mxu0 %v301
        %v396 = vpop.f32.mrf.mxu0
        %v397 = vadd.f32 %v347, %v396
        %398 = vmatmul.f32.gmra.mxu0 %v303
        %v399 = vpop.f32.mrf.mxu0
        %v400 = vadd.f32 %v347, %v399
        %401 = vmatmul.f32.gmra.mxu0 %v305
        %v402 = vpop.f32.mrf.mxu0
        %v403 = vadd.f32 %v347, %v402
        %404 = vmatmul.f32.gmra.mxu0 %v307
        %v405 = vpop.f32.mrf.mxu0
        %v406 = vadd.f32 %v347, %v405
        %407 = vmatmul.f32.gmra.mxu0 %v309
        %v408 = vpop.f32.mrf.mxu0
        %v409 = vadd.f32 %v347, %v408
        %410 = vmatmul.f32.gmra.mxu0 %v311
        %v411 = vpop.f32.mrf.mxu0
        %v412 = vadd.f32 %v347, %v411
        %413 = vdwg.mxu0
        %414 = vmatpush.msra.mxu0 %v344
        %415 = vmatpush.msra.mxu0 %v343
        %416 = vmatpush.msra.mxu0 %v342
        %417 = vmatpush.msra.mxu0 %v341
        %418 = vmatpush.msra.mxu0 %v340
        %419 = vmatpush.msra.mxu0 %v339
        %420 = vmatpush.msra.mxu0 %v338
        %421 = vmatpush.msra.mxu0 %v337
        %422 = vmatpush.msra.mxu0 %v336
        %423 = vmatpush.msra.mxu0 %v335
        %424 = vmatpush.msra.mxu0 %v334
        %425 = vmatpush.msra.mxu0 %v333
        %426 = vmatpush.msra.mxu0 %v332
        %427 = vmatpush.msra.mxu0 %v331
        %428 = vmatpush.msra.mxu0 %v330
        %429 = vmatpush.msra.mxu0 %v329
        %430 = vmatmul.f32.gmra.mxu0 %v282
        %v431 = vpop.f32.mrf.mxu0
        %v432 = vadd.f32 %v367, %v431
        %433 = vmatmul.f32.gmra.mxu0 %v284
        %v434 = vpop.f32.mrf.mxu0
        %v435 = vadd.f32 %v370, %v434
        %436 = vmatmul.f32.gmra.mxu0 %v286
        %v437 = vpop.f32.mrf.mxu0
        %v438 = vadd.f32 %v373, %v437
        %439 = vmatmul.f32.gmra.mxu0 %v288
        %v440 = vpop.f32.mrf.mxu0
        %v441 = vadd.f32 %v376, %v440
        %442 = vmatmul.f32.gmra.mxu0 %v290
        %v443 = vpop.f32.mrf.mxu0
        %v444 = vadd.f32 %v379, %v443
        %445 = vmatmul.f32.gmra.mxu0 %v292
        %v446 = vpop.f32.mrf.mxu0
        %v447 = vadd.f32 %v382, %v446
        %448 = vmatmul.f32.gmra.mxu0 %v294
        %v449 = vpop.f32.mrf.mxu0
        %v450 = vadd.f32 %v385, %v449
        %451 = vmatmul.f32.gmra.mxu0 %v296
        %v452 = vpop.f32.mrf.mxu0
        %v453 = vadd.f32 %v388, %v452
        %454 = vmatmul.f32.gmra.mxu0 %v298
        %v455 = vpop.f32.mrf.mxu0
        %v456 = vadd.f32 %v391, %v455
        %457 = vmatmul.f32.gmra.mxu0 %v300
        %v458 = vpop.f32.mrf.mxu0
        %v459 = vadd.f32 %v394, %v458
        %460 = vmatmul.f32.gmra.mxu0 %v302
        %v461 = vpop.f32.mrf.mxu0
        %v462 = vadd.f32 %v397, %v461
        %463 = vmatmul.f32.gmra.mxu0 %v304
        %v464 = vpop.f32.mrf.mxu0
        %v465 = vadd.f32 %v400, %v464
        %466 = vmatmul.f32.gmra.mxu0 %v306
        %v467 = vpop.f32.mrf.mxu0
        %v468 = vadd.f32 %v403, %v467
        %469 = vmatmul.f32.gmra.mxu0 %v308
        %v470 = vpop.f32.mrf.mxu0
        %v471 = vadd.f32 %v406, %v470
        %472 = vmatmul.f32.gmra.mxu0 %v310
        %v473 = vpop.f32.mrf.mxu0
        %v474 = vadd.f32 %v409, %v473
        %475 = vmatmul.f32.gmra.mxu0 %v312
        %v476 = vpop.f32.mrf.mxu0
        %v477 = vadd.f32 %v412, %v476
        %478 = vdwg.mxu0
        %v479 = vmax.f32 %v432, 0.0
        %v480 = vmax.f32 %v435, 0.0
        %v481 = vmax.f32 %v438, 0.0
        %v482 = vmax.f32 %v441, 0.0
        %v483 = vmax.f32 %v444, 0.0
        %v484 = vmax.f32 %v447, 0.0
        %v485 = vmax.f32 %v450, 0.0
        %v486 = vmax.f32 %v453, 0.0
        %v487 = vmax.f32 %v456, 0.0
        %v488 = vmax.f32 %v459, 0.0
        %v489 = vmax.f32 %v462, 0.0
        %v490 = vmax.f32 %v465, 0.0
        %v491 = vmax.f32 %v468, 0.0
        %v492 = vmax.f32 %v471, 0.0
        %v493 = vmax.f32 %v474, 0.0
        %v494 = vmax.f32 %v477, 0.0
        %v495 = vld [vmem:[#allocation7] sm:$0xff]
        %v496 = vld [vmem:[#allocation7 + $0x8] sm:$0xff]
        %v497 = vld [vmem:[#allocation7 + $0x10] sm:$0xff]
        %v498 = vld [vmem:[#allocation7 + $0x18] sm:$0xff]
        %v499 = vld [vmem:[#allocation7 + $0x20] sm:$0xff]
        %v500 = vld [vmem:[#allocation7 + $0x28] sm:$0xff]
        %v501 = vld [vmem:[#allocation7 + $0x30] sm:$0xff]
        %v502 = vld [vmem:[#allocation7 + $0x38] sm:$0xff]
        %v503 = vld [vmem:[#allocation7 + $0x40] sm:$0xff]
        %v504 = vld [vmem:[#allocation7 + $0x48] sm:$0xff]
        %v505 = vld [vmem:[#allocation7 + $0x50] sm:$0xff]
        %v506 = vld [vmem:[#allocation7 + $0x58] sm:$0xff]
        %v507 = vld [vmem:[#allocation7 + $0x60] sm:$0xff]
        %v508 = vld [vmem:[#allocation7 + $0x68] sm:$0xff]
        %v509 = vld [vmem:[#allocation7 + $0x70] sm:$0xff]
        %v510 = vld [vmem:[#allocation7 + $0x78] sm:$0xff]
        %v511 = vld [vmem:[%s4] sm:$0x1]
        %v513 = vperm.slane %v511, 0
        %515 = vmatpush.msra.mxu0 %v510
        %516 = vmatpush.msra.mxu0 %v509
        %517 = vmatpush.msra.mxu0 %v508
        %518 = vmatpush.msra.mxu0 %v507
        %519 = vmatpush.msra.mxu0 %v506
        %520 = vmatpush.msra.mxu0 %v505
        %521 = vmatpush.msra.mxu0 %v504
        %522 = vmatpush.msra.mxu0 %v503
        %523 = vmatpush.msra.mxu0 %v502
        %524 = vmatpush.msra.mxu0 %v501
        %525 = vmatpush.msra.mxu0 %v500
        %526 = vmatpush.msra.mxu0 %v499
        %527 = vmatpush.msra.mxu0 %v498
        %528 = vmatpush.msra.mxu0 %v497
        %529 = vmatpush.msra.mxu0 %v496
        %530 = vmatpush.msra.mxu0 %v495
        %531 = vmatmul.f32.gmra.mxu0 %v479
        %v532 = vpop.f32.mrf.mxu0
        %v533 = vadd.f32 %v513, %v532
        %534 = vmatmul.f32.gmra.mxu0 %v480
        %v535 = vpop.f32.mrf.mxu0
        %v536 = vadd.f32 %v513, %v535
        %537 = vmatmul.f32.gmra.mxu0 %v481
        %v538 = vpop.f32.mrf.mxu0
        %v539 = vadd.f32 %v513, %v538
        %540 = vmatmul.f32.gmra.mxu0 %v482
        %v541 = vpop.f32.mrf.mxu0
        %v542 = vadd.f32 %v513, %v541
        %543 = vmatmul.f32.gmra.mxu0 %v483
        %v544 = vpop.f32.mrf.mxu0
        %v545 = vadd.f32 %v513, %v544
        %546 = vmatmul.f32.gmra.mxu0 %v484
        %v547 = vpop.f32.mrf.mxu0
        %v548 = vadd.f32 %v513, %v547
        %549 = vmatmul.f32.gmra.mxu0 %v485
        %v550 = vpop.f32.mrf.mxu0
        %v551 = vadd.f32 %v513, %v550
        %552 = vmatmul.f32.gmra.mxu0 %v486
        %v553 = vpop.f32.mrf.mxu0
        %v554 = vadd.f32 %v513, %v553
        %555 = vmatmul.f32.gmra.mxu0 %v487
        %v556 = vpop.f32.mrf.mxu0
        %v557 = vadd.f32 %v513, %v556
        %558 = vmatmul.f32.gmra.mxu0 %v488
        %v559 = vpop.f32.mrf.mxu0
        %v560 = vadd.f32 %v513, %v559
        %561 = vmatmul.f32.gmra.mxu0 %v489
        %v562 = vpop.f32.mrf.mxu0
        %v563 = vadd.f32 %v513, %v562
        %564 = vmatmul.f32.gmra.mxu0 %v490
        %v565 = vpop.f32.mrf.mxu0
        %v566 = vadd.f32 %v513, %v565
        %567 = vmatmul.f32.gmra.mxu0 %v491
        %v568 = vpop.f32.mrf.mxu0
        %v569 = vadd.f32 %v513, %v568
        %570 = vmatmul.f32.gmra.mxu0 %v492
        %v571 = vpop.f32.mrf.mxu0
        %v572 = vadd.f32 %v513, %v571
        %573 = vmatmul.f32.gmra.mxu0 %v493
        %v574 = vpop.f32.mrf.mxu0
        %v575 = vadd.f32 %v513, %v574
        %576 = vmatmul.f32.gmra.mxu0 %v494
        %v577 = vpop.f32.mrf.mxu0
        %v578 = vadd.f32 %v513, %v577
        %579 = vdwg.mxu0
        %v580 = vmax.f32 %v533, 0.0
        %v581 = vmax.f32 %v536, 0.0
        %v582 = vmax.f32 %v539, 0.0
        %v583 = vmax.f32 %v542, 0.0
        %v584 = vmax.f32 %v545, 0.0
        %v585 = vmax.f32 %v548, 0.0
        %v586 = vmax.f32 %v551, 0.0
        %v587 = vmax.f32 %v554, 0.0
        %v588 = vmax.f32 %v557, 0.0
        %v589 = vmax.f32 %v560, 0.0
        %v590 = vmax.f32 %v563, 0.0
        %v591 = vmax.f32 %v566, 0.0
        %v592 = vmax.f32 %v569, 0.0
        %v593 = vmax.f32 %v572, 0.0
        %v594 = vmax.f32 %v575, 0.0
        %v595 = vmax.f32 %v578, 0.0
        %596 = vst [vmem:[%s278] sm:$0xff] %v580
        %597 = vst [vmem:[%s278 + $0x8] sm:$0xff] %v581
        %598 = vst [vmem:[%s278 + $0x10] sm:$0xff] %v582
        %599 = vst [vmem:[%s278 + $0x18] sm:$0xff] %v583
        %600 = vst [vmem:[%s278 + $0x20] sm:$0xff] %v584
        %601 = vst [vmem:[%s278 + $0x28] sm:$0xff] %v585
        %602 = vst [vmem:[%s278 + $0x30] sm:$0xff] %v586
        %603 = vst [vmem:[%s278 + $0x38] sm:$0xff] %v587
        %604 = vst [vmem:[%s278 + $0x40] sm:$0xff] %v588
        %605 = vst [vmem:[%s278 + $0x48] sm:$0xff] %v589
        %606 = vst [vmem:[%s278 + $0x50] sm:$0xff] %v590
        %607 = vst [vmem:[%s278 + $0x58] sm:$0xff] %v591
        %608 = vst [vmem:[%s278 + $0x60] sm:$0xff] %v592
        %609 = vst [vmem:[%s278 + $0x68] sm:$0xff] %v593
        %610 = vst [vmem:[%s278 + $0x70] sm:$0xff] %v594
        %611 = vst [vmem:[%s278 + $0x78] sm:$0xff] %v595
        %s612 = sand.u32 %s141, 1
        %s613 = scalar_lea.sflag [#allocation4], %s612
        %s614 = sand.u32 %s141, 1
        %s615 = smul.addr %s614, 128
        %s616 = scalar_lea.vmem [#allocation8], %s615
        // Predicated region
        $region53: #{tpu_custom_call.1} parent=39 // pred_check
          %p617 = pneg %p151
        $region54: #{tpu_custom_call.1} parent=39 // pred_check_branch
          %619 = sbr.rel (%p617) target = $region56
        $region55: #{tpu_custom_call.1} parent=39 // pred_region
          %s620 = smul.u32 16, %s23
          %622 = vsyncadd %s613, 0
          %s623 = smul.addr %s620, 8
          %s624 = scalar_lea.hbm %s5, %s623
          %s625 = sshll.u32 %s616, 4
          %s626 = int_to_ptr.vmem [resolvable:$true] %s625
          %s627 = sshll.u32 %s624, 4
          %s628 = int_to_ptr.hbm [resolvable:$true] %s627
          %633 = dma.vmem_to_hbm [thread:$0]  %s626, 2048, %s628, %s613, 128, 128, 8
        $region56: #{tpu_custom_call.1} parent=39 // pred_fallthru
          _
      $region40: #{tpu_custom_call.1} parent=5 // pred_fallthru
        _
      %p634 = scmp.le.s32.totalorder 2, %s18
      // Predicated region
      $region57: #{tpu_custom_call.1} parent=5 // pred_check
        %p635 = pneg %p634
      $region58: #{tpu_custom_call.1} parent=5 // pred_check_branch
        %637 = sbr.rel (%p635) target = $region60
      $region59: #{tpu_custom_call.1} parent=5 // pred_region
        %s638 = ssub.s32 %s18, 2
        // Predicated region
        $region61: #{tpu_custom_call.1} parent=59 // pred_check
          %p639 = pneg %p157
        $region62: #{tpu_custom_call.1} parent=59 // pred_check_branch
          %641 = sbr.rel (%p639) target = $region64
        $region63: #{tpu_custom_call.1} parent=59 // pred_region
          %s642 = sand.u32 %s142, 1
          %s643 = scalar_lea.sflag [#allocation4], %s642
          %s644 = sand.u32 %s142, 1
          %s645 = smul.addr %s644, 128
          %s646 = scalar_lea.vmem [#allocation8], %s645
          %648 = dma.done %s643, 2048
        $region64: #{tpu_custom_call.1} parent=59 // pred_fallthru
          _
      $region60: #{tpu_custom_call.1} parent=5 // pred_fallthru
        _
    $region6: #{tpu_custom_call.1} parent=1 // loop_footer
      %s22 = sadd.s32 1, %s18
    $region7: #{tpu_custom_call.1} parent=1 // loop_footer_branch
      %17 = sbr.rel target = $region3
    $region8: #{tpu_custom_call.1} parent=1 // loop_exit
      _
    %649 = vsyncpa [#allocation3], 1
    %s650 = scalar_lea.sflag [#allocation3], 1
    %651 = vsyncpa %s650, 1
    %652 = vsyncpa [#allocation6], 1
    %653 = vsyncpa [#allocation4], 1
    %s654 = scalar_lea.sflag [#allocation4], 1
    %655 = vsyncpa %s654, 1

</llo_original>
